<compile_context>
chip_gen: v7x
topology: tpu7x:2x2x1
jax: 0.10.0
libtpu: 0.0.40
codegen_flags: <defaults>
</compile_context>

<pallas_src>
import jax
import jax.numpy as jnp
from jax import lax
from jax.experimental import pallas as pl
from jax.experimental.pallas import tpu as pltpu

# Module hyper-parameters (from ResidualDilatedConvLayer.__init__)
KERNEL_SIZE = 7
DILATION = 2
PAD = DILATION * (KERNEL_SIZE - 1) // 2  # = 6 -> "same" output length
LN_EPS = 1e-5
_INV_SQRT2 = 0.7071067811865476


def _residual_dilated_conv_kernel(x_ref, w_ref, p_ref, o_ref):
    # x_ref: (Bt, C, L)   unpadded inputs for Bt batch elements
    # w_ref: (C, K*C)     packed conv weight: w_ref[:, k*C:(k+1)*C] == conv_w[:, :, k]
    # p_ref: (3, C, 1)    [conv bias ; LN gamma ; LN beta] as channel columns
    # o_ref: (Bt, C, L)   outputs
    Bt, C, L = x_ref.shape
    K = KERNEL_SIZE

    lane = lax.broadcasted_iota(jnp.int32, (C, L), 1)

    # Load each (unpadded) batch tile once; reused for all K taps and the residual.
    xs = [x_ref[b].astype(jnp.float32) for b in range(Bt)]

    # Build the fused RHS (K*C, Bt*L).  Row-block k / col-block b holds
    # x_b[:, pos + k*DILATION - PAD]  (zero where out of range).
    row_blocks = []
    for k in range(K):
        s = k * DILATION - PAD                       # static shift in [-PAD, +PAD]
        cols = []
        if s == 0:
            cols = xs
        else:
            valid = (lane + s >= 0) & (lane + s < L)
            for b in range(Bt):
                rolled = pltpu.roll(xs[b], shift=(-s) % L, axis=1)  # col j <- x[:, j+s]
                cols.append(jnp.where(valid, rolled, 0.0))
        row_blocks.append(cols[0] if Bt == 1 else jnp.concatenate(cols, axis=1))
    rhs = row_blocks[0] if K == 1 else jnp.concatenate(row_blocks, axis=0)  # (K*C, Bt*L)

    # Single MXU push for the whole dilated conv of the block.
    # (At very small C a VPU broadcast-FMA formulation could skip the MXU entirely.)
    bias = p_ref[0].astype(jnp.float32)              # (C, 1)
    gamma = p_ref[1].astype(jnp.float32)             # (C, 1)
    beta = p_ref[2].astype(jnp.float32)              # (C, 1)
    acc = jnp.dot(w_ref[...].astype(jnp.float32), rhs,
                  preferred_element_type=jnp.float32) + bias        # (C, Bt*L)

    # LayerNorm over the channel axis (per sequence position), biased variance.
    mean = jnp.mean(acc, axis=0, keepdims=True)
    var = jnp.mean((acc - mean) ** 2, axis=0, keepdims=True)
    y = (acc - mean) * lax.rsqrt(var + LN_EPS) * gamma + beta

    # Exact (erf) GELU — matches nn.GELU() default semantics.
    gelu = 0.5 * y * (1.0 + lax.erf(y * jnp.float32(_INV_SQRT2)))

    # Residual add and per-batch writeback (lane-aligned static slices).
    for b in range(Bt):
        o_ref[b] = (xs[b] + gelu[:, b * L:(b + 1) * L]).astype(o_ref.dtype)


def residual_dilated_conv_layer(x, conv_w, conv_b, ln_gamma, ln_beta, *, batch_tile=None):
    """x: (B, C, L); conv_w: (C, C, K); conv_b / ln_gamma / ln_beta: (C,)."""
    B, C, L = x.shape
    K = conv_w.shape[-1]
    assert conv_w.shape == (C, C, K)

    if batch_tile is None:
        # Largest divisor of B that is <= 8 (amortizes the ~0.35 us/step overhead).
        batch_tile = 1
        for bt in range(min(B, 8), 0, -1):
            if B % bt == 0:
                batch_tile = bt
                break
    if B % batch_tile != 0:
        raise ValueError(f"batch_tile={batch_tile} must divide B={B}")
    grid = (B // batch_tile,)

    # Pack weights so the K taps contract in one matmul: (C_out, K*C_in).
    w_pack = jnp.transpose(conv_w, (0, 2, 1)).reshape(C, K * C)
    # Merge bias / gamma / beta into a single small slab -> one DMA per step.
    params = jnp.stack([conv_b, ln_gamma, ln_beta], axis=0).reshape(3, C, 1)

    grid_spec = pltpu.PrefetchScalarGridSpec(
        num_scalar_prefetch=0,
        grid=grid,
        in_specs=[
            pl.BlockSpec((batch_tile, C, L), lambda i: (i, 0, 0)),
            pl.BlockSpec((C, K * C), lambda i: (0, 0)),
            pl.BlockSpec((3, C, 1), lambda i: (0, 0, 0)),
        ],
        out_specs=pl.BlockSpec((batch_tile, C, L), lambda i: (i, 0, 0)),
    )

    # Batch axis is "parallel": on multi-TensorCore parts the grid steps are
    # sharded across cores (keep grid >= num cores by lowering batch_tile if
    # needed).  For very large C/L, add an L-tiling axis with a 2*PAD halo.
    return pl.pallas_call(
        _residual_dilated_conv_kernel,
        out_shape=jax.ShapeDtypeStruct((B, C, L), x.dtype),
        grid_spec=grid_spec,
        compiler_params=pltpu.CompilerParams(
            dimension_semantics=("parallel",),
            vmem_limit_bytes=32 * 1024 * 1024,
        ),
    )(x, w_pack, params)


def reference_forward(x, conv_w, conv_b, ln_gamma, ln_beta):
    """Pure-JAX reference matching the PyTorch module semantics."""
    out = lax.conv_general_dilated(
        x, conv_w,
        window_strides=(1,),
        padding=[(PAD, PAD)],
        rhs_dilation=(DILATION,),
        dimension_numbers=("NCH", "OIH", "NCH"),
    )
    out = out + conv_b[None, :, None]
    mean = jnp.mean(out, axis=1, keepdims=True)
    var = jnp.mean((out - mean) ** 2, axis=1, keepdims=True)
    norm = (out - mean) / jnp.sqrt(var + LN_EPS)
    y = norm * ln_gamma[None, :, None] + ln_beta[None, :, None]
    gelu = 0.5 * y * (1.0 + lax.erf(y / jnp.sqrt(2.0)))
    return x + gelu


if __name__ == "__main__":
    # Small NCL input consistent with Conv1d(channels, channels, 7, dilation=2).
    B, C, L = 4, 8, 128

    key = jax.random.PRNGKey(0)
    kx, kw, kb = jax.random.split(key, 3)

    x = jax.random.normal(kx, (B, C, L), dtype=jnp.float32)

    # Deterministic synthetic init (Conv1d-style uniform bound = 1/sqrt(C*K)).
    bound = 1.0 / jnp.sqrt(jnp.float32(C * KERNEL_SIZE))
    conv_w = jax.random.uniform(kw, (C, C, KERNEL_SIZE), jnp.float32, -bound, bound)
    conv_b = jax.random.uniform(kb, (C,), jnp.float32, -bound, bound)
    ln_gamma = jnp.ones((C,), jnp.float32)
    ln_beta = jnp.zeros((C,), jnp.float32)

    # batch_tile=2 -> 2 batch elements fused per grid step, 2 parallel grid steps.
    out = residual_dilated_conv_layer(x, conv_w, conv_b, ln_gamma, ln_beta, batch_tile=2)
    out = jax.block_until_ready(out)

    ref = reference_forward(x, conv_w, conv_b, ln_gamma, ln_beta)
    assert out.shape == (B, C, L)
    assert jnp.allclose(out, ref, atol=1e-4, rtol=1e-4), (
        "mismatch vs reference: max abs err = "
        f"{float(jnp.max(jnp.abs(out - ref)))}"
    )

    print("KERNEL_OK")
</pallas_src>

<mosaic_0001>
module attributes {stable_mosaic.version = 11 : i64} {
  func.func @_residual_dilated_conv_kernel(%arg0: i32, %arg1: memref<2x8x128xf32, #tpu.memory_space<vmem>>, %arg2: memref<8x56xf32, #tpu.memory_space<vmem>>, %arg3: memref<3x8x1xf32, #tpu.memory_space<vmem>>, %arg4: memref<2x8x128xf32, #tpu.memory_space<vmem>>) attributes {dimension_semantics = [#tpu.dimension_semantics<parallel>], iteration_bounds = array<i64: 2>, scalar_prefetch = 0 : i64, scratch_operands = 0 : i64, tpu.core_type = #tpu.core_type<tc>, window_params = [{transform_indices = @transform_0, window_bounds = array<i64: 2, 8, 128>}, {pipeline_mode = #tpu.pipeline_mode<synchronous>, transform_indices = @transform_1, window_bounds = array<i64: 8, 56>}, {pipeline_mode = #tpu.pipeline_mode<synchronous>, transform_indices = @transform_2, window_bounds = array<i64: 3, 8, 1>}, {transform_indices = @transform_3, window_bounds = array<i64: 2, 8, 128>}]} {
    %0 = tpu.iota {dimensions = array<i32: 1>} : vector<8x128xi32>
    %c0 = arith.constant 0 : index
    %c0_0 = arith.constant 0 : index
    %c0_1 = arith.constant 0 : index
    %1 = vector.load %arg1[%c0, %c0_0, %c0_1] : memref<2x8x128xf32, #tpu.memory_space<vmem>>, vector<1x8x128xf32>
    %2 = vector.shape_cast %1 : vector<1x8x128xf32> to vector<8x128xf32>
    %c1 = arith.constant 1 : index
    %c0_2 = arith.constant 0 : index
    %c0_3 = arith.constant 0 : index
    %3 = vector.load %arg1[%c1, %c0_2, %c0_3] : memref<2x8x128xf32, #tpu.memory_space<vmem>>, vector<1x8x128xf32>
    %4 = vector.shape_cast %3 : vector<1x8x128xf32> to vector<8x128xf32>
    %c-6_i32 = arith.constant -6 : i32
    %5 = vector.broadcast %c-6_i32 : i32 to vector<8x128xi32>
    %6 = arith.addi %0, %5 : vector<8x128xi32>
    %c0_i32 = arith.constant 0 : i32
    %7 = vector.broadcast %c0_i32 : i32 to vector<8x128xi32>
    %8 = arith.cmpi sge, %6, %7 : vector<8x128xi32>
    %c-6_i32_4 = arith.constant -6 : i32
    %9 = vector.broadcast %c-6_i32_4 : i32 to vector<8x128xi32>
    %10 = arith.addi %0, %9 : vector<8x128xi32>
    %c128_i32 = arith.constant 128 : i32
    %11 = vector.broadcast %c128_i32 : i32 to vector<8x128xi32>
    %12 = arith.cmpi slt, %10, %11 : vector<8x128xi32>
    %13 = arith.andi %8, %12 : vector<8x128xi1>
    %c6_i32 = arith.constant 6 : i32
    %14 = tpu.dynamic_rotate %2 by %c6_i32 dim 1 : vector<8x128xf32>, i32 -> vector<8x128xf32>
    %cst = arith.constant 0.000000e+00 : f32
    %15 = vector.broadcast %cst : f32 to vector<8x128xf32>
    %16 = arith.select %13, %14, %15 : vector<8x128xi1>, vector<8x128xf32>
    %c6_i32_5 = arith.constant 6 : i32
    %17 = tpu.dynamic_rotate %4 by %c6_i32_5 dim 1 : vector<8x128xf32>, i32 -> vector<8x128xf32>
    %cst_6 = arith.constant 0.000000e+00 : f32
    %18 = vector.broadcast %cst_6 : f32 to vector<8x128xf32>
    %19 = arith.select %13, %17, %18 : vector<8x128xi1>, vector<8x128xf32>
    %20 = tpu.concatenate %16, %19 in 1 : vector<8x128xf32>, vector<8x128xf32> -> vector<8x256xf32>
    %c-4_i32 = arith.constant -4 : i32
    %21 = vector.broadcast %c-4_i32 : i32 to vector<8x128xi32>
    %22 = arith.addi %0, %21 : vector<8x128xi32>
    %c0_i32_7 = arith.constant 0 : i32
    %23 = vector.broadcast %c0_i32_7 : i32 to vector<8x128xi32>
    %24 = arith.cmpi sge, %22, %23 : vector<8x128xi32>
    %c-4_i32_8 = arith.constant -4 : i32
    %25 = vector.broadcast %c-4_i32_8 : i32 to vector<8x128xi32>
    %26 = arith.addi %0, %25 : vector<8x128xi32>
    %c128_i32_9 = arith.constant 128 : i32
    %27 = vector.broadcast %c128_i32_9 : i32 to vector<8x128xi32>
    %28 = arith.cmpi slt, %26, %27 : vector<8x128xi32>
    %29 = arith.andi %24, %28 : vector<8x128xi1>
    %c4_i32 = arith.constant 4 : i32
    %30 = tpu.dynamic_rotate %2 by %c4_i32 dim 1 : vector<8x128xf32>, i32 -> vector<8x128xf32>
    %cst_10 = arith.constant 0.000000e+00 : f32
    %31 = vector.broadcast %cst_10 : f32 to vector<8x128xf32>
    %32 = arith.select %29, %30, %31 : vector<8x128xi1>, vector<8x128xf32>
    %c4_i32_11 = arith.constant 4 : i32
    %33 = tpu.dynamic_rotate %4 by %c4_i32_11 dim 1 : vector<8x128xf32>, i32 -> vector<8x128xf32>
    %cst_12 = arith.constant 0.000000e+00 : f32
    %34 = vector.broadcast %cst_12 : f32 to vector<8x128xf32>
    %35 = arith.select %29, %33, %34 : vector<8x128xi1>, vector<8x128xf32>
    %36 = tpu.concatenate %32, %35 in 1 : vector<8x128xf32>, vector<8x128xf32> -> vector<8x256xf32>
    %c-2_i32 = arith.constant -2 : i32
    %37 = vector.broadcast %c-2_i32 : i32 to vector<8x128xi32>
    %38 = arith.addi %0, %37 : vector<8x128xi32>
    %c0_i32_13 = arith.constant 0 : i32
    %39 = vector.broadcast %c0_i32_13 : i32 to vector<8x128xi32>
    %40 = arith.cmpi sge, %38, %39 : vector<8x128xi32>
    %c-2_i32_14 = arith.constant -2 : i32
    %41 = vector.broadcast %c-2_i32_14 : i32 to vector<8x128xi32>
    %42 = arith.addi %0, %41 : vector<8x128xi32>
    %c128_i32_15 = arith.constant 128 : i32
    %43 = vector.broadcast %c128_i32_15 : i32 to vector<8x128xi32>
    %44 = arith.cmpi slt, %42, %43 : vector<8x128xi32>
    %45 = arith.andi %40, %44 : vector<8x128xi1>
    %c2_i32 = arith.constant 2 : i32
    %46 = tpu.dynamic_rotate %2 by %c2_i32 dim 1 : vector<8x128xf32>, i32 -> vector<8x128xf32>
    %cst_16 = arith.constant 0.000000e+00 : f32
    %47 = vector.broadcast %cst_16 : f32 to vector<8x128xf32>
    %48 = arith.select %45, %46, %47 : vector<8x128xi1>, vector<8x128xf32>
    %c2_i32_17 = arith.constant 2 : i32
    %49 = tpu.dynamic_rotate %4 by %c2_i32_17 dim 1 : vector<8x128xf32>, i32 -> vector<8x128xf32>
    %cst_18 = arith.constant 0.000000e+00 : f32
    %50 = vector.broadcast %cst_18 : f32 to vector<8x128xf32>
    %51 = arith.select %45, %49, %50 : vector<8x128xi1>, vector<8x128xf32>
    %52 = tpu.concatenate %48, %51 in 1 : vector<8x128xf32>, vector<8x128xf32> -> vector<8x256xf32>
    %53 = tpu.concatenate %2, %4 in 1 : vector<8x128xf32>, vector<8x128xf32> -> vector<8x256xf32>
    %c2_i32_19 = arith.constant 2 : i32
    %54 = vector.broadcast %c2_i32_19 : i32 to vector<8x128xi32>
    %55 = arith.addi %0, %54 : vector<8x128xi32>
    %c0_i32_20 = arith.constant 0 : i32
    %56 = vector.broadcast %c0_i32_20 : i32 to vector<8x128xi32>
    %57 = arith.cmpi sge, %55, %56 : vector<8x128xi32>
    %c2_i32_21 = arith.constant 2 : i32
    %58 = vector.broadcast %c2_i32_21 : i32 to vector<8x128xi32>
    %59 = arith.addi %0, %58 : vector<8x128xi32>
    %c128_i32_22 = arith.constant 128 : i32
    %60 = vector.broadcast %c128_i32_22 : i32 to vector<8x128xi32>
    %61 = arith.cmpi slt, %59, %60 : vector<8x128xi32>
    %62 = arith.andi %57, %61 : vector<8x128xi1>
    %c126_i32 = arith.constant 126 : i32
    %63 = tpu.dynamic_rotate %2 by %c126_i32 dim 1 : vector<8x128xf32>, i32 -> vector<8x128xf32>
    %cst_23 = arith.constant 0.000000e+00 : f32
    %64 = vector.broadcast %cst_23 : f32 to vector<8x128xf32>
    %65 = arith.select %62, %63, %64 : vector<8x128xi1>, vector<8x128xf32>
    %c126_i32_24 = arith.constant 126 : i32
    %66 = tpu.dynamic_rotate %4 by %c126_i32_24 dim 1 : vector<8x128xf32>, i32 -> vector<8x128xf32>
    %cst_25 = arith.constant 0.000000e+00 : f32
    %67 = vector.broadcast %cst_25 : f32 to vector<8x128xf32>
    %68 = arith.select %62, %66, %67 : vector<8x128xi1>, vector<8x128xf32>
    %69 = tpu.concatenate %65, %68 in 1 : vector<8x128xf32>, vector<8x128xf32> -> vector<8x256xf32>
    %c4_i32_26 = arith.constant 4 : i32
    %70 = vector.broadcast %c4_i32_26 : i32 to vector<8x128xi32>
    %71 = arith.addi %0, %70 : vector<8x128xi32>
    %c0_i32_27 = arith.constant 0 : i32
    %72 = vector.broadcast %c0_i32_27 : i32 to vector<8x128xi32>
    %73 = arith.cmpi sge, %71, %72 : vector<8x128xi32>
    %c4_i32_28 = arith.constant 4 : i32
    %74 = vector.broadcast %c4_i32_28 : i32 to vector<8x128xi32>
    %75 = arith.addi %0, %74 : vector<8x128xi32>
    %c128_i32_29 = arith.constant 128 : i32
    %76 = vector.broadcast %c128_i32_29 : i32 to vector<8x128xi32>
    %77 = arith.cmpi slt, %75, %76 : vector<8x128xi32>
    %78 = arith.andi %73, %77 : vector<8x128xi1>
    %c124_i32 = arith.constant 124 : i32
    %79 = tpu.dynamic_rotate %2 by %c124_i32 dim 1 : vector<8x128xf32>, i32 -> vector<8x128xf32>
    %cst_30 = arith.constant 0.000000e+00 : f32
    %80 = vector.broadcast %cst_30 : f32 to vector<8x128xf32>
    %81 = arith.select %78, %79, %80 : vector<8x128xi1>, vector<8x128xf32>
    %c124_i32_31 = arith.constant 124 : i32
    %82 = tpu.dynamic_rotate %4 by %c124_i32_31 dim 1 : vector<8x128xf32>, i32 -> vector<8x128xf32>
    %cst_32 = arith.constant 0.000000e+00 : f32
    %83 = vector.broadcast %cst_32 : f32 to vector<8x128xf32>
    %84 = arith.select %78, %82, %83 : vector<8x128xi1>, vector<8x128xf32>
    %85 = tpu.concatenate %81, %84 in 1 : vector<8x128xf32>, vector<8x128xf32> -> vector<8x256xf32>
    %c6_i32_33 = arith.constant 6 : i32
    %86 = vector.broadcast %c6_i32_33 : i32 to vector<8x128xi32>
    %87 = arith.addi %0, %86 : vector<8x128xi32>
    %c0_i32_34 = arith.constant 0 : i32
    %88 = vector.broadcast %c0_i32_34 : i32 to vector<8x128xi32>
    %89 = arith.cmpi sge, %87, %88 : vector<8x128xi32>
    %c6_i32_35 = arith.constant 6 : i32
    %90 = vector.broadcast %c6_i32_35 : i32 to vector<8x128xi32>
    %91 = arith.addi %0, %90 : vector<8x128xi32>
    %c128_i32_36 = arith.constant 128 : i32
    %92 = vector.broadcast %c128_i32_36 : i32 to vector<8x128xi32>
    %93 = arith.cmpi slt, %91, %92 : vector<8x128xi32>
    %94 = arith.andi %89, %93 : vector<8x128xi1>
    %c122_i32 = arith.constant 122 : i32
    %95 = tpu.dynamic_rotate %2 by %c122_i32 dim 1 : vector<8x128xf32>, i32 -> vector<8x128xf32>
    %cst_37 = arith.constant 0.000000e+00 : f32
    %96 = vector.broadcast %cst_37 : f32 to vector<8x128xf32>
    %97 = arith.select %94, %95, %96 : vector<8x128xi1>, vector<8x128xf32>
    %c122_i32_38 = arith.constant 122 : i32
    %98 = tpu.dynamic_rotate %4 by %c122_i32_38 dim 1 : vector<8x128xf32>, i32 -> vector<8x128xf32>
    %cst_39 = arith.constant 0.000000e+00 : f32
    %99 = vector.broadcast %cst_39 : f32 to vector<8x128xf32>
    %100 = arith.select %94, %98, %99 : vector<8x128xi1>, vector<8x128xf32>
    %101 = tpu.concatenate %97, %100 in 1 : vector<8x128xf32>, vector<8x128xf32> -> vector<8x256xf32>
    %102 = tpu.concatenate %20, %36, %52, %53, %69, %85, %101 in 0 : vector<8x256xf32>, vector<8x256xf32>, vector<8x256xf32>, vector<8x256xf32>, vector<8x256xf32>, vector<8x256xf32>, vector<8x256xf32> -> vector<56x256xf32>
    %c0_40 = arith.constant 0 : index
    %c0_41 = arith.constant 0 : index
    %c0_42 = arith.constant 0 : index
    %103 = vector.load %arg3[%c0_40, %c0_41, %c0_42] : memref<3x8x1xf32, #tpu.memory_space<vmem>>, vector<1x8x1xf32>
    %104 = vector.shape_cast %103 : vector<1x8x1xf32> to vector<8x1xf32>
    %c1_43 = arith.constant 1 : index
    %c0_44 = arith.constant 0 : index
    %c0_45 = arith.constant 0 : index
    %105 = vector.load %arg3[%c1_43, %c0_44, %c0_45] : memref<3x8x1xf32, #tpu.memory_space<vmem>>, vector<1x8x1xf32>
    %106 = vector.shape_cast %105 : vector<1x8x1xf32> to vector<8x1xf32>
    %c2 = arith.constant 2 : index
    %c0_46 = arith.constant 0 : index
    %c0_47 = arith.constant 0 : index
    %107 = vector.load %arg3[%c2, %c0_46, %c0_47] : memref<3x8x1xf32, #tpu.memory_space<vmem>>, vector<1x8x1xf32>
    %108 = vector.shape_cast %107 : vector<1x8x1xf32> to vector<8x1xf32>
    %c0_48 = arith.constant 0 : index
    %c0_49 = arith.constant 0 : index
    %109 = vector.load %arg2[%c0_48, %c0_49] : memref<8x56xf32, #tpu.memory_space<vmem>>, vector<8x56xf32>
    %cst_50 = arith.constant dense<0.000000e+00> : vector<8x256xf32>
    %110 = tpu.matmul %109, %102, %cst_50 {dimension_numbers = #tpu.dot_dimension_numbers<[1], [0], [0], [1], [0, 0, 1, 1], [], []>} : vector<8x56xf32>, vector<56x256xf32>, vector<8x256xf32> -> vector<8x256xf32>
    %111 = vector.broadcast %104 : vector<8x1xf32> to vector<8x256xf32>
    %112 = arith.addf %110, %111 : vector<8x256xf32>
    %cst_51 = arith.constant dense<0.000000e+00> : vector<256xf32>
    %113 = vector.multi_reduction <add>, %112, %cst_51 [0] : vector<8x256xf32> to vector<256xf32>
    %114 = vector.shape_cast %113 : vector<256xf32> to vector<1x256xf32>
    %cst_52 = arith.constant 8.000000e+00 : f32
    %115 = vector.broadcast %cst_52 : f32 to vector<1x256xf32>
    %116 = arith.divf %114, %115 : vector<1x256xf32>
    %117 = vector.broadcast %116 : vector<1x256xf32> to vector<8x256xf32>
    %118 = arith.subf %112, %117 : vector<8x256xf32>
    %119 = arith.mulf %118, %118 : vector<8x256xf32>
    %cst_53 = arith.constant dense<0.000000e+00> : vector<256xf32>
    %120 = vector.multi_reduction <add>, %119, %cst_53 [0] : vector<8x256xf32> to vector<256xf32>
    %121 = vector.shape_cast %120 : vector<256xf32> to vector<1x256xf32>
    %cst_54 = arith.constant 8.000000e+00 : f32
    %122 = vector.broadcast %cst_54 : f32 to vector<1x256xf32>
    %123 = arith.divf %121, %122 : vector<1x256xf32>
    %124 = vector.broadcast %116 : vector<1x256xf32> to vector<8x256xf32>
    %125 = arith.subf %112, %124 : vector<8x256xf32>
    %cst_55 = arith.constant 9.99999974E-6 : f32
    %126 = vector.broadcast %cst_55 : f32 to vector<1x256xf32>
    %127 = arith.addf %123, %126 : vector<1x256xf32>
    %128 = math.rsqrt %127 : vector<1x256xf32>
    %129 = vector.broadcast %128 : vector<1x256xf32> to vector<8x256xf32>
    %130 = arith.mulf %125, %129 : vector<8x256xf32>
    %131 = vector.broadcast %106 : vector<8x1xf32> to vector<8x256xf32>
    %132 = arith.mulf %130, %131 : vector<8x256xf32>
    %133 = vector.broadcast %108 : vector<8x1xf32> to vector<8x256xf32>
    %134 = arith.addf %132, %133 : vector<8x256xf32>
    %cst_56 = arith.constant 5.000000e-01 : f32
    %135 = vector.broadcast %cst_56 : f32 to vector<8x256xf32>
    %136 = arith.mulf %135, %134 : vector<8x256xf32>
    %cst_57 = arith.constant 0.707106769 : f32
    %137 = vector.broadcast %cst_57 : f32 to vector<8x256xf32>
    %138 = arith.mulf %134, %137 : vector<8x256xf32>
    %139 = math.erf %138 : vector<8x256xf32>
    %cst_58 = arith.constant 1.000000e+00 : f32
    %140 = vector.broadcast %cst_58 : f32 to vector<8x256xf32>
    %141 = arith.addf %140, %139 : vector<8x256xf32>
    %142 = arith.mulf %136, %141 : vector<8x256xf32>
    %143 = vector.extract_strided_slice %142 {offsets = [0, 0], sizes = [8, 128], strides = [1, 1]} : vector<8x256xf32> to vector<8x128xf32>
    %144 = arith.addf %2, %143 : vector<8x128xf32>
    %c0_59 = arith.constant 0 : index
    %c0_60 = arith.constant 0 : index
    %c0_61 = arith.constant 0 : index
    %145 = vector.load %arg4[%c0_59, %c0_60, %c0_61] : memref<2x8x128xf32, #tpu.memory_space<vmem>>, vector<1x8x128xf32>
    %146 = vector.shape_cast %145 : vector<1x8x128xf32> to vector<8x128xf32>
    %147 = vector.shape_cast %144 : vector<8x128xf32> to vector<1x8x128xf32>
    tpu.vector_store %arg4[%c0_59, %c0_60, %c0_61], %147 {strides = array<i32>} : memref<2x8x128xf32, #tpu.memory_space<vmem>>, vector<1x8x128xf32>,
    %148 = vector.extract_strided_slice %142 {offsets = [0, 128], sizes = [8, 128], strides = [1, 1]} : vector<8x256xf32> to vector<8x128xf32>
    %149 = arith.addf %4, %148 : vector<8x128xf32>
    %c1_62 = arith.constant 1 : index
    %c0_63 = arith.constant 0 : index
    %c0_64 = arith.constant 0 : index
    %150 = vector.load %arg4[%c1_62, %c0_63, %c0_64] : memref<2x8x128xf32, #tpu.memory_space<vmem>>, vector<1x8x128xf32>
    %151 = vector.shape_cast %150 : vector<1x8x128xf32> to vector<8x128xf32>
    %152 = vector.shape_cast %149 : vector<8x128xf32> to vector<1x8x128xf32>
    tpu.vector_store %arg4[%c1_62, %c0_63, %c0_64], %152 {strides = array<i32>} : memref<2x8x128xf32, #tpu.memory_space<vmem>>, vector<1x8x128xf32>,
    return
  }
  func.func @transform_0(%arg0: i32) -> (i32, i32, i32) {
    %c0_i32 = arith.constant 0 : i32
    %c0_i32_0 = arith.constant 0 : i32
    %c0_i32_1 = arith.constant 0 : i32
    return %arg0, %c0_i32, %c0_i32_0 : i32, i32, i32
  }
  func.func @transform_1(%arg0: i32) -> (i32, i32) {
    %c0_i32 = arith.constant 0 : i32
    %c0_i32_0 = arith.constant 0 : i32
    %c0_i32_1 = arith.constant 0 : i32
    return %c0_i32, %c0_i32_0 : i32, i32
  }
  func.func @transform_2(%arg0: i32) -> (i32, i32, i32) {
    %c0_i32 = arith.constant 0 : i32
    %c0_i32_0 = arith.constant 0 : i32
    %c0_i32_1 = arith.constant 0 : i32
    %c0_i32_2 = arith.constant 0 : i32
    return %c0_i32, %c0_i32_0, %c0_i32_1 : i32, i32, i32
  }
  func.func @transform_3(%arg0: i32) -> (i32, i32, i32) {
    %c0_i32 = arith.constant 0 : i32
    %c0_i32_0 = arith.constant 0 : i32
    %c0_i32_1 = arith.constant 0 : i32
    return %arg0, %c0_i32, %c0_i32_0 : i32, i32, i32
  }
}

</mosaic_0001>

<llo_original>
// kernel: tpu_custom_call.1
$region0: #{tpu_custom_call.1}
  #allocation0 [shape = 'u32[]', space=smem, size = 0x4, offset = 0x4, fixed_abs, tag = 'smem constant byte address 0x4 - core index']
  #allocation1 [shape = 'u32[144,128]{1,0:T(1,128)}', space=vmem, size = 0x12000, scoped, tag = 'internal scratch']
  %s0 = inlined_call_operand.hbm [shape: f32[4,8,128], index: 0, kind: input, shape index: {}]
  %s1 = inlined_call_operand.vmem [shape: f32[8,56], index: 1, kind: input, shape index: {}]
  %s2 = inlined_call_operand.vmem [shape: f32[3,8,1], index: 2, kind: input, shape index: {}]
  %s3 = inlined_call_operand.hbm [shape: f32[4,8,128], index: 3, kind: output, shape index: {}]
  %s4 = sld [smem:[#allocation0]]
  $region49: #{tpu_custom_call.1} parent=0
    _
  %s6 = ssub.s32 1, %s4
  %s7 = scalar_select 0, %s6, %s4
  $region1: #{tpu_custom_call.1} parent=0
    #allocation2 [shape = 'u8[16384]{0}', space=vmem, size = 0x4000, scoped, tag = 'input window, operand 0']
    #allocation3 [shape = 's32[2]{0}', space=sflag, size = 0x8, scoped, tag = 'scoped memory for tpu_custom_call.1']
    #allocation4 [shape = 's32[2]{0}', space=sflag, size = 0x8, scoped, tag = 'scoped memory for tpu_custom_call.1']
    #allocation5 [shape = 'u8[16384]{0}', space=vmem, size = 0x4000, scoped, tag = 'output window, operand 0']
    %8 = vsyncpa [#allocation3], 0
    %s9 = scalar_lea.sflag [#allocation3], 1
    %10 = vsyncpa %s9, 0
    %11 = vsyncpa [#allocation4], 0
    %s12 = scalar_lea.sflag [#allocation4], 1
    %13 = vsyncpa %s12, 0
    loop: start=0, step=1, limit=4
    $region2: #{tpu_custom_call.1} parent=1 // loop_pre_header
      _
    $region3: #{tpu_custom_call.1} parent=1 // loop_header
      %s15 = sphi 0, %s19
      %p16 = scmp.ge.s32.totalorder %s15, 4
      %s25 = sphi 0, %s27
      %s28 = sphi 0, %s25
      %s29 = sphi 0, %s28
      %s45 = sphi 0, %s29
      %s49 = sphi 0, %s49
      %s51 = sphi 0, %s49
      %s52 = sphi 0, %s51
      %s66 = sphi 0, %s52
      %s70 = sphi 0, %s70
      %s72 = sphi 0, %s70
      %s73 = sphi 0, %s72
      %s87 = sphi 0, %s73
      %s93 = sphi 0, %s95
      %s96 = sphi 0, %s93
      %s97 = sphi 0, %s96
      %s113 = sphi 0, %s97
    $region4: #{tpu_custom_call.1} parent=1 // loop_header_branch
      %18 = sbr.rel (%p16) target = $region8
    $region5: #{tpu_custom_call.1} parent=1 // loop_body
      %s20 = ssub.s32 %s15, 1
      %s21 = ssub.s32 %s15, 2
      %s22 = sadd.s32 %s15, 1
      %s23 = ssub.s32 %s15, %s22
      %p24 = scmp.eq.s32.totalorder %s23, 0
      %s26 = sadd.s32 %s25, 1
      %s27 = scalar_select %p24, %s25, %s26
      %p30 = pneg %p24
      %p31 = scmp.eq.s32.totalorder %s15, 1
      %p32 = por %p30, %p31
      %p33 = scmp.ne.s32.totalorder %s25, %s28
      %p34 = scmp.eq.s32.totalorder %s15, 0
      %p35 = por %p33, %p34
      %p36 = scmp.ne.s32.totalorder %s25, %s28
      %p37 = scmp.eq.s32.totalorder %s20, 1
      %p38 = por %p36, %p37
      %p39 = scmp.ne.s32.totalorder %s28, %s29
      %p40 = scmp.eq.s32.totalorder %s20, 0
      %p41 = por %p39, %p40
      %p42 = scmp.ne.s32.totalorder %s28, %s29
      %p43 = scmp.eq.s32.totalorder %s21, 1
      %p44 = por %p42, %p43
      %p46 = scmp.ne.s32.totalorder %s29, %s45
      %p47 = scmp.eq.s32.totalorder %s21, 0
      %p48 = por %p46, %p47
      %s50 = sadd.s32 %s49, 1
      %p53 = scmp.eq.s32.totalorder %s15, 1
      %p54 = scmp.ne.s32.totalorder %s49, %s51
      %p55 = scmp.eq.s32.totalorder %s15, 0
      %p56 = por %p54, %p55
      %p57 = scmp.ne.s32.totalorder %s49, %s51
      %p58 = scmp.eq.s32.totalorder %s20, 1
      %p59 = por %p57, %p58
      %p60 = scmp.ne.s32.totalorder %s51, %s52
      %p61 = scmp.eq.s32.totalorder %s20, 0
      %p62 = por %p60, %p61
      %p63 = scmp.ne.s32.totalorder %s51, %s52
      %p64 = scmp.eq.s32.totalorder %s21, 1
      %p65 = por %p63, %p64
      %p67 = scmp.ne.s32.totalorder %s52, %s66
      %p68 = scmp.eq.s32.totalorder %s21, 0
      %p69 = por %p67, %p68
      %s71 = sadd.s32 %s70, 1
      %p74 = scmp.eq.s32.totalorder %s15, 1
      %p75 = scmp.ne.s32.totalorder %s70, %s72
      %p76 = scmp.eq.s32.totalorder %s15, 0
      %p77 = por %p75, %p76
      %p78 = scmp.ne.s32.totalorder %s70, %s72
      %p79 = scmp.eq.s32.totalorder %s20, 1
      %p80 = por %p78, %p79
      %p81 = scmp.ne.s32.totalorder %s72, %s73
      %p82 = scmp.eq.s32.totalorder %s20, 0
      %p83 = por %p81, %p82
      %p84 = scmp.ne.s32.totalorder %s72, %s73
      %p85 = scmp.eq.s32.totalorder %s21, 1
      %p86 = por %p84, %p85
      %p88 = scmp.ne.s32.totalorder %s73, %s87
      %p89 = scmp.eq.s32.totalorder %s21, 0
      %p90 = por %p88, %p89
      %s91 = ssub.s32 %s15, %s22
      %p92 = scmp.eq.s32.totalorder %s91, 0
      %s94 = sadd.s32 %s93, 1
      %s95 = scalar_select %p92, %s93, %s94
      %p98 = pneg %p92
      %p99 = scmp.eq.s32.totalorder %s15, 1
      %p100 = por %p98, %p99
      %p101 = scmp.ne.s32.totalorder %s93, %s96
      %p102 = scmp.eq.s32.totalorder %s15, 0
      %p103 = por %p101, %p102
      %p104 = scmp.ne.s32.totalorder %s93, %s96
      %p105 = scmp.eq.s32.totalorder %s20, 1
      %p106 = por %p104, %p105
      %p107 = scmp.ne.s32.totalorder %s96, %s97
      %p108 = scmp.eq.s32.totalorder %s20, 0
      %p109 = por %p107, %p108
      %p110 = scmp.ne.s32.totalorder %s96, %s97
      %p111 = scmp.eq.s32.totalorder %s21, 1
      %p112 = por %p110, %p111
      %p114 = scmp.ne.s32.totalorder %s97, %s113
      %p115 = scmp.eq.s32.totalorder %s21, 0
      %p116 = por %p114, %p115
      %p117 = scmp.le.s32.totalorder 1, %s15
      %p118 = scmp.lt.s32.totalorder %s15, 3
      %p119 = pnand %p117, %p118
      %p120 = pneg %p119
      // Predicated region
      $region9: #{tpu_custom_call.1} parent=5 // pred_check
        _
      $region10: #{tpu_custom_call.1} parent=5 // pred_check_branch
        %122 = sbr.rel (%p119) target = $region12
      $region11: #{tpu_custom_call.1} parent=5 // pred_region
        %s123 = ssub.s32 %s15, 1
        // Predicated region
        $region13: #{tpu_custom_call.1} parent=11 // pred_check
          %p124 = pneg %p62
        $region14: #{tpu_custom_call.1} parent=11 // pred_check_branch
          %126 = sbr.rel (%p124) target = $region16
        $region15: #{tpu_custom_call.1} parent=11 // pred_region
          _
        $region16: #{tpu_custom_call.1} parent=11 // pred_fallthru
          _
        // Predicated region
        $region17: #{tpu_custom_call.1} parent=11 // pred_check
          %p127 = pneg %p83
        $region18: #{tpu_custom_call.1} parent=11 // pred_check_branch
          %129 = sbr.rel (%p127) target = $region20
        $region19: #{tpu_custom_call.1} parent=11 // pred_region
          _
        $region20: #{tpu_custom_call.1} parent=11 // pred_fallthru
          _
      $region12: #{tpu_custom_call.1} parent=5 // pred_fallthru
        _
      %p130 = scmp.lt.s32.totalorder %s15, 2
      // Predicated region
      $region21: #{tpu_custom_call.1} parent=5 // pred_check
        %p131 = pneg %p130
      $region22: #{tpu_custom_call.1} parent=5 // pred_check_branch
        %133 = sbr.rel (%p131) target = $region24
      $region23: #{tpu_custom_call.1} parent=5 // pred_region
        // Predicated region
        $region25: #{tpu_custom_call.1} parent=23 // pred_check
          %p134 = pneg %p35
        $region26: #{tpu_custom_call.1} parent=23 // pred_check_branch
          %136 = sbr.rel (%p134) target = $region28
        $region27: #{tpu_custom_call.1} parent=23 // pred_region
          %s137 = sand.u32 %s25, 1
          %s138 = scalar_lea.sflag [#allocation3], %s137
          %s139 = sand.u32 %s25, 1
          %s140 = smul.addr %s139, 16
          %s141 = scalar_lea.vmem [#allocation2], %s140
          %s142 = smul.u32 2, %s15
          %s144 = ssub.s32 256, 256
          %145 = vsyncadd %s138, %s144
          %s146 = smul.addr %s142, 128
          %s147 = scalar_lea.hbm %s0, %s146
          %s148 = sshll.u32 %s141, 4
          %s149 = int_to_ptr.vmem [resolvable:$true] %s148
          %154 = dma.hbm_to_vmem [thread:$0]  %s147, 256, %s149, %s138, 128, 128, 8
        $region28: #{tpu_custom_call.1} parent=23 // pred_fallthru
          _
      $region24: #{tpu_custom_call.1} parent=5 // pred_fallthru
        _
      %p155 = scmp.le.s32.totalorder 1, %s15
      %p156 = scmp.lt.s32.totalorder %s15, 3
      %p157 = pnand %p155, %p156
      %p158 = pneg %p157
      // Predicated region
      $region29: #{tpu_custom_call.1} parent=5 // pred_check
        _
      $region30: #{tpu_custom_call.1} parent=5 // pred_check_branch
        %160 = sbr.rel (%p157) target = $region32
      $region31: #{tpu_custom_call.1} parent=5 // pred_region
        %s161 = ssub.s32 %s15, 1
        %s162 = sand.u32 %s28, 1
        %s163 = scalar_lea.sflag [#allocation3], %s162
        %s164 = sand.u32 %s28, 1
        %s165 = smul.addr %s164, 16
        %s166 = scalar_lea.vmem [#allocation2], %s165
        // Predicated region
        $region33: #{tpu_custom_call.1} parent=31 // pred_check
          %p167 = pneg %p41
        $region34: #{tpu_custom_call.1} parent=31 // pred_check_branch
          %169 = sbr.rel (%p167) target = $region36
        $region35: #{tpu_custom_call.1} parent=31 // pred_region
          %170 = dma.done %s163, 256
        $region36: #{tpu_custom_call.1} parent=31 // pred_fallthru
          _
        %s171 = sand.u32 %s28, 1
        %s172 = scalar_lea.sflag [#allocation3], %s171
        %s173 = sand.u32 %s28, 1
        %s174 = smul.addr %s173, 16
        %s175 = scalar_lea.vmem [#allocation2], %s174
        %p176 = pneg %p41
        %p177 = pneg %p38
        %p178 = pneg %p62
        %p179 = pneg %p59
        %p180 = pneg %p83
        %p181 = pneg %p80
        %p182 = pneg %p109
        %p183 = pneg %p106
        %s184 = sand.u32 %s96, 1
        %s185 = scalar_lea.sflag [#allocation4], %s184
        %s186 = sand.u32 %s96, 1
        %s187 = smul.addr %s186, 16
        %s188 = scalar_lea.vmem [#allocation5], %s187
        %s189 = smul.u32 2, %s20
        %s190 = smul.u32 2, %s20
        %v191 = vlaneseq
        %v192 = vand.u32 %v191, 127
        %v193 = vld [vmem:[%s166] sm:$0xff]
        %s194 = scalar_lea.vmem %s166, 8 [#allocation2]
        %v195 = vld [vmem:[%s194] sm:$0xff]
        %v196 = vadd.s32 %v192, 4294967290
        %vm197 = vcmp.ge.s32.totalorder %v196, 0
        %vm198 = vcmp.lt.s32.totalorder %v196, 128
        %vm199 = vmand %vm197, %vm198
        %200 = vrot.lane.b32.xlu0 %v193, 6
        %v201 = vpop.permute.xlu0 %200
        %v202 = vsel %vm199, %v201, 0.0
        %203 = vrot.lane.b32.xlu0 %v195, 6
        %v204 = vpop.permute.xlu0 %203
        %v205 = vsel %vm199, %v204, 0.0
        %v206 = vadd.s32 %v192, 4294967292
        %vm207 = vcmp.ge.s32.totalorder %v206, 0
        %vm208 = vcmp.lt.s32.totalorder %v206, 128
        %vm209 = vmand %vm207, %vm208
        %210 = vrot.lane.b32.xlu0 %v193, 4
        %v211 = vpop.permute.xlu0 %210
        %v212 = vsel %vm209, %v211, 0.0
        %213 = vrot.lane.b32.xlu0 %v195, 4
        %v214 = vpop.permute.xlu0 %213
        %v215 = vsel %vm209, %v214, 0.0
        %v216 = vadd.s32 %v192, 4294967294
        %vm217 = vcmp.ge.s32.totalorder %v216, 0
        %vm218 = vcmp.lt.s32.totalorder %v216, 128
        %vm219 = vmand %vm217, %vm218
        %220 = vrot.lane.b32.xlu0 %v193, 2
        %v221 = vpop.permute.xlu0 %220
        %v222 = vsel %vm219, %v221, 0.0
        %223 = vrot.lane.b32.xlu0 %v195, 2
        %v224 = vpop.permute.xlu0 %223
        %v225 = vsel %vm219, %v224, 0.0
        %v226 = vadd.s32 %v192, 2
        %vm227 = vcmp.ge.s32.totalorder %v226, 0
        %vm228 = vcmp.lt.s32.totalorder %v226, 128
        %vm229 = vmand %vm227, %vm228
        %230 = vrot.lane.b32.xlu0 %v193, 126
        %v231 = vpop.permute.xlu0 %230
        %v232 = vsel %vm229, %v231, 0.0
        %233 = vrot.lane.b32.xlu0 %v195, 126
        %v234 = vpop.permute.xlu0 %233
        %v235 = vsel %vm229, %v234, 0.0
        %v236 = vadd.s32 %v192, 4
        %vm237 = vcmp.ge.s32.totalorder %v236, 0
        %vm238 = vcmp.lt.s32.totalorder %v236, 128
        %vm239 = vmand %vm237, %vm238
        %240 = vrot.lane.b32.xlu0 %v193, 124
        %v241 = vpop.permute.xlu0 %240
        %v242 = vsel %vm239, %v241, 0.0
        %243 = vrot.lane.b32.xlu0 %v195, 124
        %v244 = vpop.permute.xlu0 %243
        %v245 = vsel %vm239, %v244, 0.0
        %v246 = vadd.s32 %v192, 6
        %vm247 = vcmp.ge.s32.totalorder %v246, 0
        %vm248 = vcmp.lt.s32.totalorder %v246, 128
        %vm249 = vmand %vm247, %vm248
        %250 = vrot.lane.b32.xlu0 %v193, 122
        %v251 = vpop.permute.xlu0 %250
        %v252 = vsel %vm249, %v251, 0.0
        %253 = vrot.lane.b32.xlu0 %v195, 122
        %v254 = vpop.permute.xlu0 %253
        %v255 = vsel %vm249, %v254, 0.0
        %v256 = vld [vmem:[%s2] sm:$0xff]
        %s257 = scalar_lea.vmem %s2, 8
        %v258 = vld [vmem:[%s257] sm:$0xff]
        %s259 = scalar_lea.vmem %s2, 16
        %v260 = vld [vmem:[%s259] sm:$0xff]
        %v261 = vld [vmem:[%s1] sm:$0xff]
        %263 = vset.pattern.permute.xlu0 0
        %264 = vperm.xlu0 %263, %v256
        %v265 = vpop.permute.xlu0 %264
        %vm267 = vcmask 457728
        %v269 = vsel %vm267, %v261, 0
        %271 = vmatprep.subr.mxu0 %v205
        %272 = vmatpush1.msra.mxu0 %v202
        %273 = vmatprep.subr.mxu0 %v215
        %274 = vmatpush1.msra.mxu0 %v212
        %275 = vmatprep.subr.mxu0 %v225
        %276 = vmatpush1.msra.mxu0 %v222
        %277 = vmatprep.subr.mxu0 %v195
        %278 = vmatpush1.msra.mxu0 %v193
        %279 = vmatprep.subr.mxu0 %v235
        %280 = vmatpush1.msra.mxu0 %v232
        %281 = vmatprep.subr.mxu0 %v245
        %282 = vmatpush1.msra.mxu0 %v242
        %283 = vmatprep.subr.mxu0 %v255
        %284 = vmatpush1.msra.mxu0 %v252
        %285 = vmatprep.subr.mxu0 0.0
        %286 = vmatpush1.msra.mxu0 0.0
        %287 = vmatprep.subr.mxu0 0.0
        %288 = vmatpush1.msra.mxu0 0.0
        %289 = vmatprep.subr.mxu0 0.0
        %290 = vmatpush1.msra.mxu0 0.0
        %291 = vmatprep.subr.mxu0 0.0
        %292 = vmatpush1.msra.mxu0 0.0
        %293 = vmatprep.subr.mxu0 0.0
        %294 = vmatpush1.msra.mxu0 0.0
        %295 = vmatprep.subr.mxu0 0.0
        %296 = vmatpush1.msra.mxu0 0.0
        %297 = vmatprep.subr.mxu0 0.0
        %298 = vmatpush1.msra.mxu0 0.0
        %299 = vmatprep.subr.mxu0 0.0
        %300 = vmatpush1.msra.mxu0 0.0
        %301 = vmatprep.subr.mxu0 0.0
        %302 = vmatpush1.msra.mxu0 0.0
        %303 = vmatprep.subr.mxu0 0.0
        %304 = vmatpush1.msra.mxu0 0.0
        %305 = vmatprep.subr.mxu0 0.0
        %306 = vmatpush1.msra.mxu0 0.0
        %307 = vmatprep.subr.mxu0 0.0
        %308 = vmatpush1.msra.mxu0 0.0
        %309 = vmatprep.subr.mxu0 0.0
        %310 = vmatpush1.msra.mxu0 0.0
        %311 = vmatprep.subr.mxu0 0.0
        %312 = vmatpush1.msra.mxu0 0.0
        %313 = vmatprep.subr.mxu0 0.0
        %314 = vmatpush1.msra.mxu0 0.0
        %315 = vmatprep.subr.mxu0 0.0
        %316 = vmatpush1.msra.mxu0 0.0
        %317 = vmatprep.subr.mxu0 0.0
        %318 = vmatpush1.msra.mxu0 0.0
        %319 = vmatprep.subr.mxu0 0.0
        %320 = vmatpush1.msra.mxu0 0.0
        %321 = vmatprep.subr.mxu0 0.0
        %322 = vmatpush1.msra.mxu0 0.0
        %323 = vmatprep.subr.mxu0 0.0
        %324 = vmatpush1.msra.mxu0 0.0
        %325 = vmatprep.subr.mxu0 0.0
        %326 = vmatpush1.msra.mxu0 0.0
        %327 = vmatprep.subr.mxu0 0.0
        %328 = vmatpush1.msra.mxu0 0.0
        %329 = vmatprep.subr.mxu0 0.0
        %330 = vmatpush1.msra.mxu0 0.0
        %331 = vmatprep.subr.mxu0 0.0
        %332 = vmatpush1.msra.mxu0 0.0
        %333 = vmatprep.subr.mxu0 0.0
        %334 = vmatpush1.msra.mxu0 0.0
        %335 = vmatprep.mubr.f32.mxu0 0.0
        %336 = vmatmul.mubr.f32.gmra.mrb[0].mxu0 %v269
        %v337 = vpop.f32.mrb[0].mxu0
        %v338 = vadd.f32 %v265, %v337
        %v339 = vpop.f32.mrb[0].mxu0
        %v340 = vadd.f32 %v265, %v339
        %341 = vdwg.mxu0
        %v342 = vrot.slane %v338, 4
        %v343 = vadd.f32 %v338, %v342
        %v344 = vrot.slane %v343, 2
        %v345 = vadd.f32 %v343, %v344
        %v346 = vrot.slane %v345, 1
        %v347 = vadd.f32 %v345, %v346
        %v348 = vrot.slane %v340, 4
        %v349 = vadd.f32 %v340, %v348
        %v350 = vrot.slane %v349, 2
        %v351 = vadd.f32 %v349, %v350
        %v352 = vrot.slane %v351, 1
        %v353 = vadd.f32 %v351, %v352
        %v354 = vrcp.pop 8.0
        %v355 = vmul.f32 %v347, %v354
        %v356 = vmul.f32 %v353, %v354
        %v357 = vsub.f32 %v338, %v355
        %v358 = vsub.f32 %v340, %v356
        %v359 = vmul.f32 %v357, %v357
        %v360 = vmul.f32 %v358, %v358
        %v361 = vrot.slane %v359, 4
        %v362 = vadd.f32 %v359, %v361
        %v363 = vrot.slane %v362, 2
        %v364 = vadd.f32 %v362, %v363
        %v365 = vrot.slane %v364, 1
        %v366 = vadd.f32 %v364, %v365
        %v367 = vrot.slane %v360, 4
        %v368 = vadd.f32 %v360, %v367
        %v369 = vrot.slane %v368, 2
        %v370 = vadd.f32 %v368, %v369
        %v371 = vrot.slane %v370, 1
        %v372 = vadd.f32 %v370, %v371
        %v373 = vmul.f32 %v366, %v354
        %v374 = vmul.f32 %v372, %v354
        %v375 = vadd.f32 %v373, 1e-05
        %v376 = vadd.f32 %v374, 1e-05
        %v377 = vrsqrt.pop %v375
        %v378 = vrsqrt.pop %v376
        %v379 = vmul.f32 %v357, %v377
        %v380 = vmul.f32 %v358, %v378
        %382 = vset.pattern.permute.xlu0 0
        %383 = vperm.xlu0 %382, %v258
        %v384 = vpop.permute.xlu0 %383
        %v386 = vmul.f32 %v379, %v384
        %v387 = vmul.f32 %v380, %v384
        %389 = vset.pattern.permute.xlu0 0
        %390 = vperm.xlu0 %389, %v260
        %v391 = vpop.permute.xlu0 %390
        %v393 = vadd.f32 %v386, %v391
        %v394 = vadd.f32 %v387, %v391
        %v395 = vmul.f32 %v393, 0.5
        %v396 = vmul.f32 %v394, 0.5
        %v397 = vmul.f32 %v393, 0.70710677
        %v398 = vmul.f32 %v394, 0.70710677
        %v399 = verf.f32.pop %v397
        %v400 = verf.f32.pop %v398
        %v401 = vadd.f32 %v399, 1.0
        %v402 = vadd.f32 %v400, 1.0
        %v403 = vmul.f32 %v395, %v401
        %v404 = vmul.f32 %v396, %v402
        %v405 = vadd.f32 %v193, %v403
        %406 = vst [vmem:[%s188] sm:$0xff] %v405
        %v407 = vadd.f32 %v195, %v404
        %s408 = scalar_lea.vmem %s188, 8 [#allocation5]
        %409 = vst [vmem:[%s408] sm:$0xff] %v407
        %s410 = sand.u32 %s96, 1
        %s411 = scalar_lea.sflag [#allocation4], %s410
        %s412 = sand.u32 %s96, 1
        %s413 = smul.addr %s412, 16
        %s414 = scalar_lea.vmem [#allocation5], %s413
        // Predicated region
        $region37: #{tpu_custom_call.1} parent=31 // pred_check
          %p415 = pneg %p106
        $region38: #{tpu_custom_call.1} parent=31 // pred_check_branch
          %417 = sbr.rel (%p415) target = $region40
        $region39: #{tpu_custom_call.1} parent=31 // pred_region
          %s418 = smul.u32 2, %s20
          %s420 = ssub.s32 256, 256
          %421 = vsyncadd %s411, %s420
          %s422 = smul.addr %s418, 128
          %s423 = scalar_lea.hbm %s3, %s422
          %s424 = sshll.u32 %s414, 4
          %s425 = int_to_ptr.vmem [resolvable:$true] %s424
          %430 = dma.vmem_to_hbm [thread:$0]  %s425, 256, %s423, %s411, 128, 128, 8
        $region40: #{tpu_custom_call.1} parent=31 // pred_fallthru
          _
      $region32: #{tpu_custom_call.1} parent=5 // pred_fallthru
        _
      %p431 = scmp.le.s32.totalorder 2, %s15
      // Predicated region
      $region41: #{tpu_custom_call.1} parent=5 // pred_check
        %p432 = pneg %p431
      $region42: #{tpu_custom_call.1} parent=5 // pred_check_branch
        %434 = sbr.rel (%p432) target = $region44
      $region43: #{tpu_custom_call.1} parent=5 // pred_region
        %s435 = ssub.s32 %s15, 2
        // Predicated region
        $region45: #{tpu_custom_call.1} parent=43 // pred_check
          %p436 = pneg %p112
        $region46: #{tpu_custom_call.1} parent=43 // pred_check_branch
          %438 = sbr.rel (%p436) target = $region48
        $region47: #{tpu_custom_call.1} parent=43 // pred_region
          %s439 = sand.u32 %s97, 1
          %s440 = scalar_lea.sflag [#allocation4], %s439
          %s441 = sand.u32 %s97, 1
          %s442 = smul.addr %s441, 16
          %s443 = scalar_lea.vmem [#allocation5], %s442
          %444 = dma.done %s440, 256
        $region48: #{tpu_custom_call.1} parent=43 // pred_fallthru
          _
      $region44: #{tpu_custom_call.1} parent=5 // pred_fallthru
        _
    $region6: #{tpu_custom_call.1} parent=1 // loop_footer
      %s19 = sadd.s32 1, %s15
    $region7: #{tpu_custom_call.1} parent=1 // loop_footer_branch
      %14 = sbr.rel target = $region3
    $region8: #{tpu_custom_call.1} parent=1 // loop_exit
      _
    %445 = vsyncpa [#allocation3], 1
    %s446 = scalar_lea.sflag [#allocation3], 1
    %447 = vsyncpa %s446, 1
    %448 = vsyncpa [#allocation4], 1
    %s449 = scalar_lea.sflag [#allocation4], 1
    %450 = vsyncpa %s449, 1

</llo_original>
